<compile_context>
chip_gen: v7x
topology: tpu7x:2x2x1
jax: 0.10.0
libtpu: 0.0.40
codegen_flags: <defaults>
</compile_context>

<pallas_src>
import functools
import math

import jax
import jax.numpy as jnp
from jax.experimental import pallas as pl
from jax.experimental.pallas import tpu as pltpu


def _round_up(n, m):
    return pl.cdiv(n, m) * m


def _embed_kernel(t_per_step, scale, ids_ref, table_ref, out_ref):
    """One grid step: gather `t_per_step` embedding rows and scale them.

    ids_ref:   SMEM scalar-prefetch ref with the flat (padded) token ids.
    table_ref: (vocab, d_model) embedding table, VMEM-resident.
    out_ref:   (t_per_step, d_model) lane-dense output tile.
    """
    base = pl.program_id(0) * t_per_step

    def gather_row(t, carry):
        tok = ids_ref[base + t]                              # scalar from SMEM
        out_ref[pl.ds(t, 1), :] = table_ref[pl.ds(tok, 1), :]
        return carry

    jax.lax.fori_loop(0, t_per_step, gather_row, 0)

    # Single vectorized scale over the whole tile (applied before writeback).
    out_ref[...] = out_ref[...] * scale


def embeddings_forward(token_ids, table, *, tokens_per_step=256):
    """Pallas equivalent of `nn.Embedding(vocab, d_model)(x) * sqrt(d_model)`."""
    vocab, d_model = table.shape
    B, S = token_ids.shape
    N = B * S

    # Batch T tokens per grid step (multiple of 8 sublanes); pad N up to it.
    T = int(min(tokens_per_step, _round_up(N, 8)))
    T = int(_round_up(T, 8))
    N_pad = int(_round_up(N, T))

    flat_ids = token_ids.reshape(N).astype(jnp.int32)
    flat_ids = jnp.clip(flat_ids, 0, vocab - 1)          # OOB safety
    flat_ids = jnp.pad(flat_ids, (0, N_pad - N))         # pad with id 0

    scale = math.sqrt(float(d_model))
    kernel = functools.partial(_embed_kernel, T, scale)

    out_flat = pl.pallas_call(
        kernel,
        out_shape=jax.ShapeDtypeStruct((N_pad, d_model), table.dtype),
        grid_spec=pltpu.PrefetchScalarGridSpec(
            num_scalar_prefetch=1,              # flat_ids lands in SMEM
            grid=(N_pad // T,),                 # T tokens per grid step
            in_specs=[
                # Whole table resident in VMEM (constant block index -> the
                # pipeline does not re-DMA it every step).
                pl.BlockSpec((vocab, d_model), lambda i, ids: (0, 0)),
            ],
            out_specs=pl.BlockSpec((T, d_model), lambda i, ids: (i, 0)),
        ),
        compiler_params=pltpu.CompilerParams(
            # Disjoint output rows per step -> shardable across v7x's two TCs.
            dimension_semantics=("parallel",)),
    )(flat_ids, table)

    return out_flat[:N].reshape(B, S, d_model)


def get_mask(q_embeddings, tgt_embeddings, tgt_mask):
    """JAX port of the module's get_mask (boolean mask bookkeeping)."""
    q_len = q_embeddings.shape[1]
    t_len = tgt_embeddings.shape[1]
    tl = q_len + t_len
    masks = jnp.full((tl, tl), True)
    masks = masks.at[q_len:, q_len:].set(tgt_mask)
    masks = masks.at[:q_len, q_len:].set(False)
    return masks[None].astype(tgt_mask.dtype)


def transformer_forward(src, tgt, src_mask, tgt_mask, q_embeddings,
                        src_table, tgt_table):
    """Mirrors Transformer.forward = decode(encode(src, src_mask), ...).

    The injected encoder/decoder stacks are not defined by this module, so this
    returns exactly what the PyTorch code would hand to them.
    """
    # --- encode path ---
    src_embeddings = embeddings_forward(src, src_table)          # src_embed
    # TODO(synk): encoder stack — injected nn.Module, architecture unspecified.
    hidden_states = src_embeddings

    # --- decode path ---
    tgt_embeddings = embeddings_forward(tgt, tgt_table)          # tgt_embed
    combined_tgt_mask = get_mask(q_embeddings, tgt_embeddings, tgt_mask)
    B = tgt.shape[0]
    q_rep = jnp.tile(q_embeddings, (B, 1, 1))                    # .repeat(B,1,1)
    decoder_input = jnp.concatenate([q_rep, tgt_embeddings], axis=1)
    # TODO(synk): decoder stack — injected nn.Module, architecture unspecified.
    return decoder_input, hidden_states, src_mask, combined_tgt_mask


if __name__ == "__main__":
    d_model = 128            # multiple of 128 -> lane-dense output tiles
    vocab = 50
    B, S_src, S_tgt, Q = 2, 8, 8, 4

    key = jax.random.PRNGKey(0)
    k_st, k_tt, k_src, k_tgt, k_q = jax.random.split(key, 5)

    src_table = jax.random.normal(k_st, (vocab, d_model), dtype=jnp.float32)
    tgt_table = jax.random.normal(k_tt, (vocab, d_model), dtype=jnp.float32)
    src = jax.random.randint(k_src, (B, S_src), 0, vocab, dtype=jnp.int32)
    tgt = jax.random.randint(k_tgt, (B, S_tgt), 0, vocab, dtype=jnp.int32)
    q_embeddings = jax.random.normal(k_q, (1, Q, d_model), dtype=jnp.float32)

    src_mask = jnp.ones((1, 1, S_src), dtype=bool)
    tgt_mask = jnp.tril(jnp.ones((S_tgt, S_tgt), dtype=bool))    # causal

    # --- embedding kernel vs. reference ---
    emb = jax.block_until_ready(embeddings_forward(src, src_table))
    ref = jnp.take(src_table, src, axis=0) * math.sqrt(float(d_model))
    assert emb.shape == (B, S_src, d_model)
    assert jnp.allclose(emb, ref, atol=1e-5, rtol=1e-5)

    # --- exercise the padded / multi-step grid path ---
    ids2 = jax.random.randint(k_src, (3, 37), 0, vocab, dtype=jnp.int32)
    emb2 = jax.block_until_ready(
        embeddings_forward(ids2, src_table, tokens_per_step=64))
    ref2 = jnp.take(src_table, ids2, axis=0) * math.sqrt(float(d_model))
    assert jnp.allclose(emb2, ref2, atol=1e-5, rtol=1e-5)

    # --- full module plumbing (encoder/decoder stacks are TODO stubs) ---
    dec_in, hidden, _, comb_mask = transformer_forward(
        src, tgt, src_mask, tgt_mask, q_embeddings, src_table, tgt_table)
    dec_in = jax.block_until_ready(dec_in)
    assert dec_in.shape == (B, Q + S_tgt, d_model)
    assert hidden.shape == (B, S_src, d_model)
    assert comb_mask.shape == (1, Q + S_tgt, Q + S_tgt)
    assert not bool(comb_mask[0, :Q, Q:].any())   # question rows can't see tgt

    print("KERNEL_OK")
</pallas_src>

<mosaic_0001>
module attributes {stable_mosaic.version = 11 : i64} {
  func.func @_embed_kernel(%arg0: i32, %arg1: memref<16xi32, #tpu.memory_space<smem>>, %arg2: memref<50x128xf32, #tpu.memory_space<vmem>>, %arg3: memref<16x128xf32, #tpu.memory_space<vmem>>) attributes {dimension_semantics = [#tpu.dimension_semantics<parallel>], iteration_bounds = array<i64: 1>, scalar_prefetch = 1 : i64, scratch_operands = 0 : i64, tpu.core_type = #tpu.core_type<tc>, window_params = [{pipeline_mode = #tpu.pipeline_mode<synchronous>, transform_indices = @transform_0, window_bounds = array<i64: 50, 128>}, {transform_indices = @transform_1, window_bounds = array<i64: 16, 128>}]} {
    %c16_i32 = arith.constant 16 : i32
    %0 = arith.muli %arg0, %c16_i32 : i32
    %c0_i32 = arith.constant 0 : i32
    %c16_i32_0 = arith.constant 16 : i32
    %1 = arith.addi %c0_i32, %c16_i32_0 : i32
    %c1_i32 = arith.constant 1 : i32
    scf.for %arg4 = %c0_i32 to %1 step %c1_i32  : i32 {
      %6 = arith.addi %0, %arg4 : i32
      %7 = arith.index_cast %6 : i32 to index
      %8 = memref.load %arg1[%7] : memref<16xi32, #tpu.memory_space<smem>>
      %9 = arith.index_cast %8 : i32 to index
      %c0_5 = arith.constant 0 : index
      %10 = vector.load %arg2[%9, %c0_5] : memref<50x128xf32, #tpu.memory_space<vmem>>, vector<1x128xf32>
      %11 = arith.index_cast %arg4 : i32 to index
      %c0_6 = arith.constant 0 : index
      %12 = vector.load %arg3[%11, %c0_6] : memref<16x128xf32, #tpu.memory_space<vmem>>, vector<1x128xf32>
      tpu.vector_store %arg3[%11, %c0_6], %10 {strides = array<i32>} : memref<16x128xf32, #tpu.memory_space<vmem>>, vector<1x128xf32>,
    }
    %c16_i32_1 = arith.constant 16 : i32
    %c0 = arith.constant 0 : index
    %c0_2 = arith.constant 0 : index
    %2 = vector.load %arg3[%c0, %c0_2] : memref<16x128xf32, #tpu.memory_space<vmem>>, vector<16x128xf32>
    %cst = arith.constant 11.3137083 : f32
    %3 = vector.broadcast %cst : f32 to vector<16x128xf32>
    %4 = arith.mulf %2, %3 : vector<16x128xf32>
    %c0_3 = arith.constant 0 : index
    %c0_4 = arith.constant 0 : index
    %5 = vector.load %arg3[%c0_3, %c0_4] : memref<16x128xf32, #tpu.memory_space<vmem>>, vector<16x128xf32>
    tpu.vector_store %arg3[%c0_3, %c0_4], %4 {strides = array<i32>} : memref<16x128xf32, #tpu.memory_space<vmem>>, vector<16x128xf32>,
    return
  }
  func.func @transform_0(%arg0: i32, %arg1: memref<16xi32, #tpu.memory_space<smem>>) -> (i32, i32) {
    %c0_i32 = arith.constant 0 : i32
    %c0_i32_0 = arith.constant 0 : i32
    %c0_i32_1 = arith.constant 0 : i32
    return %c0_i32, %c0_i32_0 : i32, i32
  }
  func.func @transform_1(%arg0: i32, %arg1: memref<16xi32, #tpu.memory_space<smem>>) -> (i32, i32) {
    %c0_i32 = arith.constant 0 : i32
    %c0_i32_0 = arith.constant 0 : i32
    return %arg0, %c0_i32 : i32, i32
  }
}

</mosaic_0001>

<llo_original>
// kernel: tpu_custom_call.1
$region0: #{tpu_custom_call.1}
  #allocation0 [shape = 'u32[]', space=smem, size = 0x4, offset = 0x4, fixed_abs, tag = 'smem constant byte address 0x4 - core index']
  #allocation1 [shape = 'u32[144,128]{1,0:T(1,128)}', space=vmem, size = 0x12000, scoped, tag = 'internal scratch']
  #allocation2 [shape = 's32[1]{0}', space=sflag, size = 0x4, scoped, tag = 'scoped memory for tpu_custom_call.1']
  #allocation3 [shape = 'u8[512]{0}', space=smem, size = 0x200, scoped, tag = 'prefetched SMEM operand 0']
  %s0 = inlined_call_operand.hbm [shape: s32[16], index: 0, kind: input, shape index: {}]
  %s1 = inlined_call_operand.hbm [shape: f32[50,128], index: 1, kind: input, shape index: {}]
  %s2 = inlined_call_operand.hbm [shape: f32[16,128], index: 2, kind: output, shape index: {}]
  %s3 = sld [smem:[#allocation0]]
  $region25: #{tpu_custom_call.1} parent=0
    _
  %s5 = ssub.s32 1, %s3
  %s6 = scalar_select 0, %s5, %s3
  %8 = dma.hbm_to_smem %s0, 16, [#allocation3], [#allocation2]
  %9 = dma.done [#allocation2], 16
  %10 = sfence
  $region1: #{tpu_custom_call.1} parent=0
    #allocation4 [shape = 'u8[28672]{0}', space=vmem, size = 0x7000, scoped, tag = 'input window, operand 1, single buffered']
    #allocation5 [shape = 's32[1]{0}', space=sflag, size = 0x4, scoped, tag = 'scoped memory for tpu_custom_call.1']
    #allocation6 [shape = 's32[1]{0}', space=sflag, size = 0x4, scoped, tag = 'scoped memory for tpu_custom_call.1']
    #allocation7 [shape = 'u8[8192]{0}', space=vmem, size = 0x2000, scoped, tag = 'output window, operand 0, single buffered']
    %11 = vsyncpa [#allocation5], 0
    %12 = vsyncpa [#allocation6], 0
    // Predicated region
    $region2: #{tpu_custom_call.1} parent=1 // pred_check
      _
    $region3: #{tpu_custom_call.1} parent=1 // pred_check_branch
      %14 = sbr.rel (0) target = $region5
    $region4: #{tpu_custom_call.1} parent=1 // pred_region
      %s16 = ssub.s32 896, 896
      %17 = vsyncadd [#allocation5], %s16
      %s18 = sshll.u32 [#allocation4], 4
      %s19 = int_to_ptr.vmem [resolvable:$true] %s18
      %24 = dma.hbm_to_vmem [thread:$0]  %s1, 896, %s19, [#allocation5], 128, 128, 8
    $region5: #{tpu_custom_call.1} parent=1 // pred_fallthru
      _
    // Predicated region
    $region6: #{tpu_custom_call.1} parent=1 // pred_check
      _
    $region7: #{tpu_custom_call.1} parent=1 // pred_check_branch
      %26 = sbr.rel (0) target = $region9
    $region8: #{tpu_custom_call.1} parent=1 // pred_region
      %27 = dma.done [#allocation5], 896
    $region9: #{tpu_custom_call.1} parent=1 // pred_fallthru
      _
    %s28 = smul.u32 0, 16
    loop: start=0, step=1, limit=16
    $region10: #{tpu_custom_call.1} parent=1 // loop_pre_header
      _
    $region11: #{tpu_custom_call.1} parent=1 // loop_header
      %s30 = sphi 0, %s34
      %p31 = scmp.ge.s32.totalorder %s30, 16
    $region12: #{tpu_custom_call.1} parent=1 // loop_header_branch
      %33 = sbr.rel (%p31) target = $region16
    $region13: #{tpu_custom_call.1} parent=1 // loop_body
      %s35 = sadd.s32 %s28, %s30
      %s36 = sld [smem:[#allocation3 + %s35]]
      %s37 = scalar_lea.vmem [#allocation4], %s36
      %v38 = vld [vmem:[%s37] sm:$0x1]
      %s39 = scalar_lea.vmem [#allocation7], %s30
      %40 = vst [vmem:[%s39] sm:$0x1] %v38
    $region14: #{tpu_custom_call.1} parent=1 // loop_footer
      %s34 = sadd.s32 1, %s30
    $region15: #{tpu_custom_call.1} parent=1 // loop_footer_branch
      %29 = sbr.rel target = $region11
    $region16: #{tpu_custom_call.1} parent=1 // loop_exit
      _
    %v41 = vld [vmem:[#allocation7] sm:$0xff]
    %v42 = vld [vmem:[#allocation7 + $0x8] sm:$0xff]
    %v43 = vmul.f32 %v41, 11.313708
    %v44 = vmul.f32 %v42, 11.313708
    %45 = vst [vmem:[#allocation7] sm:$0xff] %v43
    %46 = vst [vmem:[#allocation7 + $0x8] sm:$0xff] %v44
    // Predicated region
    $region17: #{tpu_custom_call.1} parent=1 // pred_check
      _
    $region18: #{tpu_custom_call.1} parent=1 // pred_check_branch
      %48 = sbr.rel (0) target = $region20
    $region19: #{tpu_custom_call.1} parent=1 // pred_region
      %s50 = ssub.s32 256, 256
      %51 = vsyncadd [#allocation6], %s50
      %s52 = sshll.u32 [#allocation7], 4
      %s53 = int_to_ptr.vmem [resolvable:$true] %s52
      %58 = dma.vmem_to_hbm [thread:$0]  %s53, 256, %s2, [#allocation6], 128, 128, 8
    $region20: #{tpu_custom_call.1} parent=1 // pred_fallthru
      _
    // Predicated region
    $region21: #{tpu_custom_call.1} parent=1 // pred_check
      _
    $region22: #{tpu_custom_call.1} parent=1 // pred_check_branch
      %60 = sbr.rel (0) target = $region24
    $region23: #{tpu_custom_call.1} parent=1 // pred_region
      %61 = dma.done [#allocation6], 256
    $region24: #{tpu_custom_call.1} parent=1 // pred_fallthru
      _
    %62 = vsyncpa [#allocation5], 1
    %63 = vsyncpa [#allocation6], 1

</llo_original>
